<compile_context>
chip_gen: v7x
topology: tpu7x:2x2x1
jax: 0.10.0
libtpu: 0.0.40
codegen_flags: <defaults>
</compile_context>

<pallas_src>
import jax
import jax.numpy as jnp
from jax import lax
from jax.experimental import pallas as pl
from jax.experimental.pallas import tpu as pltpu

MASK_H, MASK_W = 41, 41          # self.mask_size
SUBLANES, LANES = 8, 128
CHUNK = SUBLANES * LANES         # 1024 f32 elements = one vreg worth of data
SUB = 8                          # chunks per inner-loop sub-slice (8 * 4 KiB loads)
MAX_CHUNKS_PER_STEP = 512        # 2 MiB f32 per input block per grid step


def _num_tensorcores_per_chip():
    # v7x has 2 TensorCores per chip (megacore); v5e/v6e have 1.
    try:
        kind = jax.devices()[0].device_kind.lower()
    except Exception:
        return 1
    return 2 if ("v7" in kind or "7x" in kind) else 1


def _make_seed_kernel(chunk_blk):
    """Kernel: accumulate sum(cues*log(sm)) and count(cues != 0) over grid axis 1."""
    n_full, rem = divmod(chunk_blk, SUB)

    def kernel(cues_ref, sm_ref, sum_ref, cnt_ref):
        s = pl.program_id(1)

        @pl.when(s == 0)
        def _():
            sum_ref[...] = jnp.zeros_like(sum_ref)
            cnt_ref[...] = jnp.zeros_like(cnt_ref)

        def accum(c, sm, acc_s, acc_c):
            # EUP log + VALU mul/cmp/add; the reduce over the leading (chunk) axis
            # is pure vreg-to-vreg adds — no cross-lane XLU traffic.
            acc_s = acc_s + jnp.sum(c * jnp.log(sm), axis=0)
            acc_c = acc_c + jnp.sum((c != 0.0).astype(jnp.float32), axis=0)
            return acc_s, acc_c

        def body(i, carry):
            start = pl.multiple_of(i * SUB, SUB)
            return accum(cues_ref[pl.ds(start, SUB), :, :],
                         sm_ref[pl.ds(start, SUB), :, :], *carry)

        zero = jnp.zeros((SUBLANES, LANES), jnp.float32)
        acc_s, acc_c = lax.fori_loop(0, n_full, body, (zero, zero))
        if rem:  # static ragged remainder of the block (chunk_blk % 8 chunks)
            acc_s, acc_c = accum(cues_ref[pl.ds(n_full * SUB, rem), :, :],
                                 sm_ref[pl.ds(n_full * SUB, rem), :, :],
                                 acc_s, acc_c)

        sum_ref[0] = sum_ref[0] + acc_s
        cnt_ref[0] = cnt_ref[0] + acc_c

    return kernel


def seeding_loss(sm_mask, attention_mask, labels=None, super_pixel=None,
                 flag_use_cuda=False):
    del labels, flag_use_cuda  # unused by the PyTorch forward as well
    B, C, H, W = sm_mask.shape
    assert (H, W) == (MASK_H, MASK_W)

    # --- glue: per-batch gate  (len(super_pixel[i].unique()) > 10), O(N) histogram ---
    _, Hs, Ws = super_pixel.shape
    K = Hs * Ws
    sp = super_pixel.reshape(B, -1).astype(jnp.int32)
    # TODO(synk): assumes the per-batch label range (after subtracting the min) fits
    # in [0, Hs*Ws) — true for SLIC-style superpixel maps; larger ranges get clipped.
    sp = jnp.clip(sp - jnp.min(sp, axis=1, keepdims=True), 0, K - 1)
    hist = jnp.zeros((B, K), jnp.int32).at[jnp.arange(B)[:, None], sp].add(1)
    uniq_count = jnp.sum(hist > 0, axis=1)
    gate = (uniq_count > 10).astype(jnp.float32)                       # [B]

    # --- glue: nearest-neighbor resize attention_mask -> [B, C, 41, 41], one gather ---
    # TODO(synk): skimage.transform.resize(order=0) edge/rounding convention is
    # approximated with pixel-center nearest indexing.
    Ha, Wa = attention_mask.shape[2], attention_mask.shape[3]
    row_idx = jnp.clip(
        jnp.round((jnp.arange(MASK_H) + 0.5) * (Ha / MASK_H) - 0.5), 0, Ha - 1
    ).astype(jnp.int32)
    col_idx = jnp.clip(
        jnp.round((jnp.arange(MASK_W) + 0.5) * (Wa / MASK_W) - 0.5), 0, Wa - 1
    ).astype(jnp.int32)
    cues = attention_mask[:, :, row_idx[:, None], col_idx[None, :]].astype(jnp.float32)
    cues = cues * gate[:, None, None, None]    # pre-apply gate; fuses with the gather

    cues_flat = cues.reshape(-1)
    sm_flat = sm_mask.astype(jnp.float32).reshape(-1)

    total = B * C * H * W
    n_floor = total // CHUNK

    if n_floor == 0:
        # Too small to tile lane-densely; plain JAX (identical math).
        log_sum = jnp.sum(cues_flat * jnp.log(sm_flat))
        count = jnp.sum(cues_flat != 0.0).astype(jnp.float32)
        return -log_sum / count

    # --- exact tiling of the flat prefix: no padded DMA at all ---
    num_parts = 2 if (_num_tensorcores_per_chip() >= 2 and n_floor >= 64) else 1
    n_per_part = n_floor // num_parts
    steps = -(-n_per_part // MAX_CHUNKS_PER_STEP)      # ceil div, Python int
    chunk_blk = n_per_part // steps                    # <= MAX_CHUNKS_PER_STEP
    n_main = num_parts * steps * chunk_blk             # chunks covered exactly
    main_elems = n_main * CHUNK

    cues_main = cues_flat[:main_elems].reshape(n_main, SUBLANES, LANES)
    sm_main = sm_flat[:main_elems].reshape(n_main, SUBLANES, LANES)

    part_shape = jax.ShapeDtypeStruct((num_parts, SUBLANES, LANES), jnp.float32)
    blk_in = pl.BlockSpec((chunk_blk, SUBLANES, LANES),
                          lambda p, s: (p * steps + s, 0, 0))
    blk_out = pl.BlockSpec((1, SUBLANES, LANES), lambda p, s: (p, 0, 0))

    sum_parts, cnt_parts = pl.pallas_call(
        _make_seed_kernel(chunk_blk),
        out_shape=(part_shape, part_shape),
        grid_spec=pltpu.PrefetchScalarGridSpec(
            num_scalar_prefetch=0,
            grid=(num_parts, steps),
            in_specs=[blk_in, blk_in],
            out_specs=[blk_out, blk_out],
        ),
        compiler_params=pltpu.CompilerParams(
            # partition axis feeds v7x megacore; streaming axis is the accumulation
            dimension_semantics=("parallel", "arbitrary"),
        ),
    )(cues_main, sm_main)

    # --- tiny un-tiled remainder (< num_parts*steps chunks + <1024 elements) ---
    tail_cues = cues_flat[main_elems:]
    tail_sm = sm_flat[main_elems:]
    log_sum = jnp.sum(sum_parts) + jnp.sum(tail_cues * jnp.log(tail_sm))
    count = jnp.sum(cnt_parts) + jnp.sum(tail_cues != 0.0).astype(jnp.float32)

    # Note: count == 0 yields NaN — same division-by-zero hazard as the PyTorch
    # original (kept deliberately to preserve forward semantics).
    return -log_sum / count


if __name__ == "__main__":
    key = jax.random.PRNGKey(0)
    k1, k2 = jax.random.split(key)

    B, C = 2, 4
    Ha = Wa = 16
    Hs = Ws = 16

    # sm_mask: positive probabilities (softmax over channels), [B, C, 41, 41]
    logits = jax.random.normal(k1, (B, C, MASK_H, MASK_W), dtype=jnp.float32)
    sm_mask = jax.nn.softmax(logits, axis=1)

    # attention_mask: [B, C, 16, 16], strictly positive
    attention_mask = jax.random.uniform(
        k2, (B, C, Ha, Wa), dtype=jnp.float32, minval=0.1, maxval=1.0)

    # super_pixel: batch 0 has 20 unique labels (gate on), batch 1 has one (gate off)
    sp0 = jnp.arange(Hs * Ws, dtype=jnp.int32).reshape(Hs, Ws) % 20
    sp1 = jnp.zeros((Hs, Ws), dtype=jnp.int32)
    super_pixel = jnp.stack([sp0, sp1], axis=0)

    labels = jnp.zeros((B,), dtype=jnp.int32)  # unused, mirrors PyTorch signature

    loss_fn = jax.jit(seeding_loss)
    loss = loss_fn(sm_mask, attention_mask, labels, super_pixel, False)
    loss = jax.block_until_ready(loss)

    # --- plain-JAX reference for sanity (sort-based gate, direct reduce) ---
    row_idx = jnp.clip(jnp.round((jnp.arange(MASK_H) + 0.5) * (Ha / MASK_H) - 0.5),
                       0, Ha - 1).astype(jnp.int32)
    col_idx = jnp.clip(jnp.round((jnp.arange(MASK_W) + 0.5) * (Wa / MASK_W) - 0.5),
                       0, Wa - 1).astype(jnp.int32)
    cues_r = attention_mask[:, :, row_idx[:, None], col_idx[None, :]]
    sp_sorted = jnp.sort(super_pixel.reshape(B, -1), axis=1)
    uniq_r = 1 + jnp.sum(sp_sorted[:, 1:] != sp_sorted[:, :-1], axis=1)
    gate_r = (uniq_r > 10).astype(jnp.float32)[:, None, None, None]
    cues_r = cues_r * gate_r
    count_r = jnp.sum(cues_r != 0.0).astype(jnp.float32)
    loss_r = -jnp.sum(cues_r * jnp.log(sm_mask)) / count_r

    assert jnp.allclose(loss, loss_r, rtol=1e-4, atol=1e-5), (loss, loss_r)
    print("KERNEL_OK")
</pallas_src>

<mosaic_0001>
module attributes {stable_mosaic.version = 11 : i64} {
  func.func private @main(%arg0: i32) attributes {dimension_semantics = [#tpu.dimension_semantics<core_parallel>], iteration_bounds = array<i64: 2>, tpu.core_type = #tpu.core_type<sc_scalar_subcore>, window_params = []} {
    return
  }
}

module attributes {stable_mosaic.version = 11 : i64} {
  func.func private @main(%arg0: i32) attributes {dimension_semantics = [#tpu.dimension_semantics<core_parallel>], iteration_bounds = array<i64: 2>, tpu.core_type = #tpu.core_type<sc_scalar_subcore>, window_params = []} {
    return
  }
}

module attributes {stable_mosaic.version = 11 : i64} {
  func.func @kernel(%arg0: i32, %arg1: i32, %arg2: memref<13x8x128xf32, #tpu.memory_space<vmem>>, %arg3: memref<13x8x128xf32, #tpu.memory_space<vmem>>, %arg4: memref<1x8x128xf32, #tpu.memory_space<vmem>>, %arg5: memref<1x8x128xf32, #tpu.memory_space<vmem>>) attributes {dimension_semantics = [#tpu.dimension_semantics<parallel>, #tpu.dimension_semantics<arbitrary>], iteration_bounds = array<i64: 1, 1>, scalar_prefetch = 0 : i64, scratch_operands = 0 : i64, tpu.core_type = #tpu.core_type<tc>, window_params = [{transform_indices = @transform_0, window_bounds = array<i64: 13, 8, 128>}, {transform_indices = @transform_1, window_bounds = array<i64: 13, 8, 128>}, {transform_indices = @transform_2, window_bounds = array<i64: 1, 8, 128>}, {transform_indices = @transform_3, window_bounds = array<i64: 1, 8, 128>}]} {
    %c0_i32 = arith.constant 0 : i32
    %0 = arith.cmpi eq, %arg1, %c0_i32 : i32
    %1 = arith.extui %0 : i1 to i32
    %c0_i32_0 = arith.constant 0 : i32
    %2 = arith.cmpi ne, %1, %c0_i32_0 : i32
    scf.if %2 {
      %cst_28 = arith.constant 0.000000e+00 : f32
      %44 = vector.broadcast %cst_28 : f32 to vector<1x8x128xf32>
      %c0_29 = arith.constant 0 : index
      %c0_30 = arith.constant 0 : index
      %c0_31 = arith.constant 0 : index
      %45 = vector.load %arg4[%c0_29, %c0_30, %c0_31] : memref<1x8x128xf32, #tpu.memory_space<vmem>>, vector<1x8x128xf32>
      tpu.vector_store %arg4[%c0_29, %c0_30, %c0_31], %44 {strides = array<i32>} : memref<1x8x128xf32, #tpu.memory_space<vmem>>, vector<1x8x128xf32>,
      %cst_32 = arith.constant 0.000000e+00 : f32
      %46 = vector.broadcast %cst_32 : f32 to vector<1x8x128xf32>
      %c0_33 = arith.constant 0 : index
      %c0_34 = arith.constant 0 : index
      %c0_35 = arith.constant 0 : index
      %47 = vector.load %arg5[%c0_33, %c0_34, %c0_35] : memref<1x8x128xf32, #tpu.memory_space<vmem>>, vector<1x8x128xf32>
      tpu.vector_store %arg5[%c0_33, %c0_34, %c0_35], %46 {strides = array<i32>} : memref<1x8x128xf32, #tpu.memory_space<vmem>>, vector<1x8x128xf32>,
    } else {
    }
    %cst = arith.constant 0.000000e+00 : f32
    %3 = vector.broadcast %cst : f32 to vector<8x128xf32>
    %c0_i32_1 = arith.constant 0 : i32
    %c8_i32 = arith.constant 8 : i32
    %4 = arith.muli %c0_i32_1, %c8_i32 : i32
    %5 = tpu.assume_multiple %4, 8 : i32
    %6 = arith.index_cast %5 : i32 to index
    %c0 = arith.constant 0 : index
    %c0_2 = arith.constant 0 : index
    %7 = vector.load %arg2[%6, %c0, %c0_2] : memref<13x8x128xf32, #tpu.memory_space<vmem>>, vector<8x8x128xf32>
    %8 = arith.index_cast %5 : i32 to index
    %c0_3 = arith.constant 0 : index
    %c0_4 = arith.constant 0 : index
    %9 = vector.load %arg3[%8, %c0_3, %c0_4] : memref<13x8x128xf32, #tpu.memory_space<vmem>>, vector<8x8x128xf32>
    %10 = math.log %9 : vector<8x8x128xf32>
    %11 = arith.mulf %7, %10 : vector<8x8x128xf32>
    %cst_5 = arith.constant dense<0.000000e+00> : vector<8x128xf32>
    %12 = vector.multi_reduction <add>, %11, %cst_5 [0] : vector<8x8x128xf32> to vector<8x128xf32>
    %13 = arith.addf %3, %12 : vector<8x128xf32>
    %cst_6 = arith.constant 0.000000e+00 : f32
    %14 = vector.broadcast %cst_6 : f32 to vector<8x8x128xf32>
    %15 = arith.cmpf one, %7, %14 : vector<8x8x128xf32>
    %16 = arith.extui %15 : vector<8x8x128xi1> to vector<8x8x128xi32>
    %17 = arith.sitofp %16 : vector<8x8x128xi32> to vector<8x8x128xf32>
    %cst_7 = arith.constant dense<0.000000e+00> : vector<8x128xf32>
    %18 = vector.multi_reduction <add>, %17, %cst_7 [0] : vector<8x8x128xf32> to vector<8x128xf32>
    %19 = arith.addf %3, %18 : vector<8x128xf32>
    %c1_i32 = arith.constant 1 : i32
    %c8 = arith.constant 8 : index
    %c0_8 = arith.constant 0 : index
    %c0_9 = arith.constant 0 : index
    %20 = vector.load %arg2[%c8, %c0_8, %c0_9] : memref<13x8x128xf32, #tpu.memory_space<vmem>>, vector<5x8x128xf32>
    %c8_10 = arith.constant 8 : index
    %c0_11 = arith.constant 0 : index
    %c0_12 = arith.constant 0 : index
    %21 = vector.load %arg3[%c8_10, %c0_11, %c0_12] : memref<13x8x128xf32, #tpu.memory_space<vmem>>, vector<5x8x128xf32>
    %22 = math.log %21 : vector<5x8x128xf32>
    %23 = arith.mulf %20, %22 : vector<5x8x128xf32>
    %cst_13 = arith.constant dense<0.000000e+00> : vector<8x128xf32>
    %24 = vector.multi_reduction <add>, %23, %cst_13 [0] : vector<5x8x128xf32> to vector<8x128xf32>
    %25 = arith.addf %13, %24 : vector<8x128xf32>
    %cst_14 = arith.constant 0.000000e+00 : f32
    %26 = vector.broadcast %cst_14 : f32 to vector<5x8x128xf32>
    %27 = arith.cmpf one, %20, %26 : vector<5x8x128xf32>
    %28 = arith.extui %27 : vector<5x8x128xi1> to vector<5x8x128xi32>
    %29 = arith.sitofp %28 : vector<5x8x128xi32> to vector<5x8x128xf32>
    %cst_15 = arith.constant dense<0.000000e+00> : vector<8x128xf32>
    %30 = vector.multi_reduction <add>, %29, %cst_15 [0] : vector<5x8x128xf32> to vector<8x128xf32>
    %31 = arith.addf %19, %30 : vector<8x128xf32>
    %c0_16 = arith.constant 0 : index
    %c0_17 = arith.constant 0 : index
    %c0_18 = arith.constant 0 : index
    %32 = vector.load %arg4[%c0_16, %c0_17, %c0_18] : memref<1x8x128xf32, #tpu.memory_space<vmem>>, vector<1x8x128xf32>
    %33 = vector.shape_cast %32 : vector<1x8x128xf32> to vector<8x128xf32>
    %34 = arith.addf %33, %25 : vector<8x128xf32>
    %c0_19 = arith.constant 0 : index
    %c0_20 = arith.constant 0 : index
    %c0_21 = arith.constant 0 : index
    %35 = vector.load %arg4[%c0_19, %c0_20, %c0_21] : memref<1x8x128xf32, #tpu.memory_space<vmem>>, vector<1x8x128xf32>
    %36 = vector.shape_cast %35 : vector<1x8x128xf32> to vector<8x128xf32>
    %37 = vector.shape_cast %34 : vector<8x128xf32> to vector<1x8x128xf32>
    tpu.vector_store %arg4[%c0_19, %c0_20, %c0_21], %37 {strides = array<i32>} : memref<1x8x128xf32, #tpu.memory_space<vmem>>, vector<1x8x128xf32>,
    %c0_22 = arith.constant 0 : index
    %c0_23 = arith.constant 0 : index
    %c0_24 = arith.constant 0 : index
    %38 = vector.load %arg5[%c0_22, %c0_23, %c0_24] : memref<1x8x128xf32, #tpu.memory_space<vmem>>, vector<1x8x128xf32>
    %39 = vector.shape_cast %38 : vector<1x8x128xf32> to vector<8x128xf32>
    %40 = arith.addf %39, %31 : vector<8x128xf32>
    %c0_25 = arith.constant 0 : index
    %c0_26 = arith.constant 0 : index
    %c0_27 = arith.constant 0 : index
    %41 = vector.load %arg5[%c0_25, %c0_26, %c0_27] : memref<1x8x128xf32, #tpu.memory_space<vmem>>, vector<1x8x128xf32>
    %42 = vector.shape_cast %41 : vector<1x8x128xf32> to vector<8x128xf32>
    %43 = vector.shape_cast %40 : vector<8x128xf32> to vector<1x8x128xf32>
    tpu.vector_store %arg5[%c0_25, %c0_26, %c0_27], %43 {strides = array<i32>} : memref<1x8x128xf32, #tpu.memory_space<vmem>>, vector<1x8x128xf32>,
    return
  }
  func.func @transform_0(%arg0: i32, %arg1: i32) -> (i32, i32, i32) {
    %c1_i32 = arith.constant 1 : i32
    %0 = arith.muli %arg0, %c1_i32 : i32
    %1 = arith.addi %0, %arg1 : i32
    %c0_i32 = arith.constant 0 : i32
    %c0_i32_0 = arith.constant 0 : i32
    %c0_i32_1 = arith.constant 0 : i32
    return %1, %c0_i32, %c0_i32_0 : i32, i32, i32
  }
  func.func @transform_1(%arg0: i32, %arg1: i32) -> (i32, i32, i32) {
    %c1_i32 = arith.constant 1 : i32
    %0 = arith.muli %arg0, %c1_i32 : i32
    %1 = arith.addi %0, %arg1 : i32
    %c0_i32 = arith.constant 0 : i32
    %c0_i32_0 = arith.constant 0 : i32
    %c0_i32_1 = arith.constant 0 : i32
    return %1, %c0_i32, %c0_i32_0 : i32, i32, i32
  }
  func.func @transform_2(%arg0: i32, %arg1: i32) -> (i32, i32, i32) {
    %c0_i32 = arith.constant 0 : i32
    %c0_i32_0 = arith.constant 0 : i32
    %c0_i32_1 = arith.constant 0 : i32
    return %arg0, %c0_i32, %c0_i32_0 : i32, i32, i32
  }
  func.func @transform_3(%arg0: i32, %arg1: i32) -> (i32, i32, i32) {
    %c0_i32 = arith.constant 0 : i32
    %c0_i32_0 = arith.constant 0 : i32
    %c0_i32_1 = arith.constant 0 : i32
    return %arg0, %c0_i32, %c0_i32_0 : i32, i32, i32
  }
}

</mosaic_0001>

<llo_original>
// kernel: seeding_loss.1
$region0: #{seeding_loss.1}
  #allocation0 [shape = 'u32[]', space=smem, size = 0x4, offset = 0x4, fixed_abs, tag = 'smem constant byte address 0x4 - core index']
  #allocation1 [shape = 'u32[144,128]{1,0:T(1,128)}', space=vmem, size = 0x12000, scoped, tag = 'internal scratch']
  %s0 = inlined_call_operand.vmem [shape: f32[13,8,128], index: 0, kind: input, shape index: {}]
  %s1 = inlined_call_operand.vmem [shape: f32[13,8,128], index: 1, kind: input, shape index: {}]
  %s2 = inlined_call_operand.vmem [shape: f32[1,8,128], index: 2, kind: output, shape index: {0}]
  %s3 = inlined_call_operand.vmem [shape: f32[1,8,128], index: 3, kind: output, shape index: {1}]
  %4 = xla_tuple %s2, %s3
  %s5 = sld [smem:[#allocation0]]
  $region30: #{seeding_loss.1} parent=0
    _
  %s7 = ssub.s32 1, %s5
  %s8 = scalar_select 0, %s7, %s5
  // Predicated region
  $region2: #{seeding_loss.1} parent=0 // pred_check
    _
  $region3: #{seeding_loss.1} parent=0 // pred_check_branch
    %10 = sbr.rel (0) target = $region5
  $region4: #{seeding_loss.1} parent=0 // pred_region
    %s11 = sadd.s32 0, 0
    %s12 = smul.u32 13, %s11
    %p13 = scmp.lt.s32.totalorder %s12, 12
    %s14 = scalar_select %p13, %s12, 12
    %s15 = smul.addr %s14, 8
    %s16 = scalar_lea.vmem %s0, %s15
    %s17 = sadd.s32 0, 0
    %s18 = smul.u32 13, %s17
  $region5: #{seeding_loss.1} parent=0 // pred_fallthru
    _
  // Predicated region
  $region6: #{seeding_loss.1} parent=0 // pred_check
    _
  $region7: #{seeding_loss.1} parent=0 // pred_check_branch
    %20 = sbr.rel (0) target = $region9
  $region8: #{seeding_loss.1} parent=0 // pred_region
    %s21 = sadd.s32 0, 0
    %s22 = smul.u32 13, %s21
    %p23 = scmp.lt.s32.totalorder %s22, 12
    %s24 = scalar_select %p23, %s22, 12
    %s25 = smul.addr %s24, 8
    %s26 = scalar_lea.vmem %s1, %s25
    %s27 = sadd.s32 0, 0
    %s28 = smul.u32 13, %s27
  $region9: #{seeding_loss.1} parent=0 // pred_fallthru
    _
  %s29 = sadd.s32 0, 0
  %s30 = smul.u32 13, %s29
  %p31 = scmp.lt.s32.totalorder %s30, 12
  %s32 = scalar_select %p31, %s30, 12
  %s33 = smul.addr %s32, 8
  %s34 = scalar_lea.vmem %s0, %s33
  %s35 = sadd.s32 0, 0
  %s36 = smul.u32 13, %s35
  %p37 = scmp.lt.s32.totalorder %s36, 12
  %s38 = scalar_select %p37, %s36, 12
  %s39 = smul.addr %s38, 8
  %s40 = scalar_lea.vmem %s1, %s39
  %s41 = sadd.s32 0, 0
  %s42 = smul.u32 13, %s41
  %p43 = scmp.lt.s32.totalorder %s42, 12
  %s44 = scalar_select %p43, %s42, 12
  %s45 = smul.addr %s44, 8
  %s46 = scalar_lea.vmem %s0, %s45
  %s47 = sadd.s32 0, 0
  %s48 = smul.u32 13, %s47
  %s49 = sadd.s32 0, 0
  %s50 = smul.u32 13, %s49
  %p51 = scmp.lt.s32.totalorder %s50, 12
  %s52 = scalar_select %p51, %s50, 12
  %s53 = smul.addr %s52, 8
  %s54 = scalar_lea.vmem %s1, %s53
  %s55 = sadd.s32 0, 0
  %s56 = smul.u32 13, %s55
  %p57 = scmp.eq.s32.totalorder 0, 0
  // Predicated region
  $region10: #{seeding_loss.1} parent=0 // pred_check
    %p58 = pneg %p57
  $region11: #{seeding_loss.1} parent=0 // pred_check_branch
    %60 = sbr.rel (%p58) target = $region13
  $region12: #{seeding_loss.1} parent=0 // pred_region
    %61 = vst [vmem:[%s2] sm:$0xff] 0.0
    %62 = vst [vmem:[%s3] sm:$0xff] 0.0
  $region13: #{seeding_loss.1} parent=0 // pred_fallthru
    _
  %s63 = smul.u32 0, 8
  %s64 = scalar_lea.vmem %s46, %s63
  %v65 = vld [vmem:[%s64] sm:$0xff]
  %v66 = vld [vmem:[%s64 + $0x8] sm:$0xff]
  %v67 = vld [vmem:[%s64 + $0x10] sm:$0xff]
  %v68 = vld [vmem:[%s64 + $0x18] sm:$0xff]
  %v69 = vld [vmem:[%s64 + $0x20] sm:$0xff]
  %v70 = vld [vmem:[%s64 + $0x28] sm:$0xff]
  %v71 = vld [vmem:[%s64 + $0x30] sm:$0xff]
  %v72 = vld [vmem:[%s64 + $0x38] sm:$0xff]
  %s73 = scalar_lea.vmem %s54, %s63
  %v74 = vld [vmem:[%s73] sm:$0xff]
  %v75 = vld [vmem:[%s73 + $0x8] sm:$0xff]
  %v76 = vld [vmem:[%s73 + $0x10] sm:$0xff]
  %v77 = vld [vmem:[%s73 + $0x18] sm:$0xff]
  %v78 = vld [vmem:[%s73 + $0x20] sm:$0xff]
  %v79 = vld [vmem:[%s73 + $0x28] sm:$0xff]
  %v80 = vld [vmem:[%s73 + $0x30] sm:$0xff]
  %v81 = vld [vmem:[%s73 + $0x38] sm:$0xff]
  %v82 = vlog2.pop %v74
  %v83 = vmul.f32 %v82, 0.6931472
  %v84 = vlog2.pop %v75
  %v85 = vmul.f32 %v84, 0.6931472
  %v86 = vlog2.pop %v76
  %v87 = vmul.f32 %v86, 0.6931472
  %v88 = vlog2.pop %v77
  %v89 = vmul.f32 %v88, 0.6931472
  %v90 = vlog2.pop %v78
  %v91 = vmul.f32 %v90, 0.6931472
  %v92 = vlog2.pop %v79
  %v93 = vmul.f32 %v92, 0.6931472
  %v94 = vlog2.pop %v80
  %v95 = vmul.f32 %v94, 0.6931472
  %v96 = vlog2.pop %v81
  %v97 = vmul.f32 %v96, 0.6931472
  %v98 = vmul.f32 %v65, %v83
  %v99 = vmul.f32 %v66, %v85
  %v100 = vmul.f32 %v67, %v87
  %v101 = vmul.f32 %v68, %v89
  %v102 = vmul.f32 %v69, %v91
  %v103 = vmul.f32 %v70, %v93
  %v104 = vmul.f32 %v71, %v95
  %v105 = vmul.f32 %v72, %v97
  %v106 = vadd.f32 %v98, %v99
  %v107 = vadd.f32 %v106, %v100
  %v108 = vadd.f32 %v107, %v101
  %v109 = vadd.f32 %v108, %v102
  %v110 = vadd.f32 %v109, %v103
  %v111 = vadd.f32 %v110, %v104
  %v112 = vadd.f32 %v111, %v105
  %v113 = vadd.f32 %v112, 0.0
  %vm114 = vcmp.ne.f32.partialorder %v65, 0.0
  %vm115 = vcmp.ne.f32.partialorder %v66, 0.0
  %vm116 = vcmp.ne.f32.partialorder %v67, 0.0
  %vm117 = vcmp.ne.f32.partialorder %v68, 0.0
  %vm118 = vcmp.ne.f32.partialorder %v69, 0.0
  %vm119 = vcmp.ne.f32.partialorder %v70, 0.0
  %vm120 = vcmp.ne.f32.partialorder %v71, 0.0
  %vm121 = vcmp.ne.f32.partialorder %v72, 0.0
  %v122 = vsel %vm114, 1, 0
  %v123 = vsel %vm115, 1, 0
  %v124 = vsel %vm116, 1, 0
  %v125 = vsel %vm117, 1, 0
  %v126 = vsel %vm118, 1, 0
  %v127 = vsel %vm119, 1, 0
  %v128 = vsel %vm120, 1, 0
  %v129 = vsel %vm121, 1, 0
  %v130 = vcvt.s32.f32 %v122
  %v131 = vcvt.s32.f32 %v123
  %v132 = vcvt.s32.f32 %v124
  %v133 = vcvt.s32.f32 %v125
  %v134 = vcvt.s32.f32 %v126
  %v135 = vcvt.s32.f32 %v127
  %v136 = vcvt.s32.f32 %v128
  %v137 = vcvt.s32.f32 %v129
  %v138 = vadd.f32 %v130, %v131
  %v139 = vadd.f32 %v138, %v132
  %v140 = vadd.f32 %v139, %v133
  %v141 = vadd.f32 %v140, %v134
  %v142 = vadd.f32 %v141, %v135
  %v143 = vadd.f32 %v142, %v136
  %v144 = vadd.f32 %v143, %v137
  %v145 = vadd.f32 %v144, 0.0
  %s146 = scalar_lea.vmem %s46, 64
  %v147 = vld [vmem:[%s146] sm:$0xff]
  %v148 = vld [vmem:[%s146 + $0x8] sm:$0xff]
  %v149 = vld [vmem:[%s146 + $0x10] sm:$0xff]
  %v150 = vld [vmem:[%s146 + $0x18] sm:$0xff]
  %v151 = vld [vmem:[%s146 + $0x20] sm:$0xff]
  %s152 = scalar_lea.vmem %s54, 64
  %v153 = vld [vmem:[%s152] sm:$0xff]
  %v154 = vld [vmem:[%s152 + $0x8] sm:$0xff]
  %v155 = vld [vmem:[%s152 + $0x10] sm:$0xff]
  %v156 = vld [vmem:[%s152 + $0x18] sm:$0xff]
  %v157 = vld [vmem:[%s152 + $0x20] sm:$0xff]
  %v158 = vlog2.pop %v153
  %v159 = vmul.f32 %v158, 0.6931472
  %v160 = vlog2.pop %v154
  %v161 = vmul.f32 %v160, 0.6931472
  %v162 = vlog2.pop %v155
  %v163 = vmul.f32 %v162, 0.6931472
  %v164 = vlog2.pop %v156
  %v165 = vmul.f32 %v164, 0.6931472
  %v166 = vlog2.pop %v157
  %v167 = vmul.f32 %v166, 0.6931472
  %v168 = vmul.f32 %v147, %v159
  %v169 = vmul.f32 %v148, %v161
  %v170 = vmul.f32 %v149, %v163
  %v171 = vmul.f32 %v150, %v165
  %v172 = vmul.f32 %v151, %v167
  %v173 = vadd.f32 %v168, %v169
  %v174 = vadd.f32 %v173, %v170
  %v175 = vadd.f32 %v174, %v171
  %v176 = vadd.f32 %v175, %v172
  %v177 = vadd.f32 %v113, %v176
  %vm178 = vcmp.ne.f32.partialorder %v147, 0.0
  %vm179 = vcmp.ne.f32.partialorder %v148, 0.0
  %vm180 = vcmp.ne.f32.partialorder %v149, 0.0
  %vm181 = vcmp.ne.f32.partialorder %v150, 0.0
  %vm182 = vcmp.ne.f32.partialorder %v151, 0.0
  %v183 = vsel %vm178, 1, 0
  %v184 = vsel %vm179, 1, 0
  %v185 = vsel %vm180, 1, 0
  %v186 = vsel %vm181, 1, 0
  %v187 = vsel %vm182, 1, 0
  %v188 = vcvt.s32.f32 %v183
  %v189 = vcvt.s32.f32 %v184
  %v190 = vcvt.s32.f32 %v185
  %v191 = vcvt.s32.f32 %v186
  %v192 = vcvt.s32.f32 %v187
  %v193 = vadd.f32 %v188, %v189
  %v194 = vadd.f32 %v193, %v190
  %v195 = vadd.f32 %v194, %v191
  %v196 = vadd.f32 %v195, %v192
  %v197 = vadd.f32 %v145, %v196
  %v198 = vld [vmem:[%s2] sm:$0xff]
  %v199 = vadd.f32 %v198, %v177
  %200 = vst [vmem:[%s2] sm:$0xff] %v199
  %v201 = vld [vmem:[%s3] sm:$0xff]
  %v202 = vadd.f32 %v201, %v197
  %203 = vst [vmem:[%s3] sm:$0xff] %v202
  // Predicated region
  $region14: #{seeding_loss.1} parent=0 // pred_check
    _
  $region15: #{seeding_loss.1} parent=0 // pred_check_branch
    %205 = sbr.rel (0) target = $region17
  $region16: #{seeding_loss.1} parent=0 // pred_region
    _
  $region17: #{seeding_loss.1} parent=0 // pred_fallthru
    _
  // Predicated region
  $region18: #{seeding_loss.1} parent=0 // pred_check
    _
  $region19: #{seeding_loss.1} parent=0 // pred_check_branch
    %207 = sbr.rel (0) target = $region21
  $region20: #{seeding_loss.1} parent=0 // pred_region
    _
  $region21: #{seeding_loss.1} parent=0 // pred_fallthru
    _
  // Predicated region
  $region22: #{seeding_loss.1} parent=0 // pred_check
    _
  $region23: #{seeding_loss.1} parent=0 // pred_check_branch
    %209 = sbr.rel (0) target = $region25
  $region24: #{seeding_loss.1} parent=0 // pred_region
    _
  $region25: #{seeding_loss.1} parent=0 // pred_fallthru
    _
  // Predicated region
  $region26: #{seeding_loss.1} parent=0 // pred_check
    _
  $region27: #{seeding_loss.1} parent=0 // pred_check_branch
    %211 = sbr.rel (0) target = $region29
  $region28: #{seeding_loss.1} parent=0 // pred_region
    _
  $region29: #{seeding_loss.1} parent=0 // pred_fallthru
    _

</llo_original>
